<compile_context>
chip_gen: v5e
topology: v5e:2x2
jax: 0.10.0
libtpu: 0.0.40
codegen_flags: <defaults>
</compile_context>

<pallas_src>
import jax
import jax.numpy as jnp
import numpy as np
from jax.experimental import pallas as pl
from jax.experimental.pallas import tpu as pltpu

IN_F = 4        # fc1 in_features
H1_F = 10       # fc1 out_features
H2_F = 8        # fc2 out_features
OUT_F = 3       # fc3 out_features
LANE = 128      # TPU lane width: padded hidden width
OUT_PAD = 8     # padded logit width stored by the kernel (cols >= 3 are exactly zero)
TILE_B = 4096   # batch tile (multiple of 16); comfortably under the scoped VMEM limit


def _round_up(n, m):
    return ((n + m - 1) // m) * m


def _vmem_limit_bytes():
    """32 MiB on v7x (64 MiB physical VMEM), 64 MiB on v5e/v6e (128 MiB physical)."""
    try:
        cap = int(pltpu.get_tpu_info().vmem_capacity_bytes)
    except Exception:
        cap = 64 * 1024 * 1024
    return min(max(cap // 2, 32 * 1024 * 1024), 64 * 1024 * 1024)


_VMEM_LIMIT = _vmem_limit_bytes()


def _choose_tile(batch):
    """16-aligned batch tile; splits into >= 2 balanced tiles once batch > TILE_B."""
    rb = _round_up(max(batch, 1), 16)
    if rb <= TILE_B:
        return rb
    n_tiles = max(2, pl.cdiv(rb, TILE_B))       # v7x: keep both TensorCores busy
    return _round_up(pl.cdiv(rb, n_tiles), 16)


def _mlp_kernel(x_ref, w1_ref, w23_ref, b_ref, o_ref):
    """Fused 3-layer MLP forward on one (tile_b, .) batch tile.

    x_ref  : (tile_b, 4)     f32   input rows
    w1_ref : (4, 128)        f32   fc1 weight, zero-padded to 128 output cols
    w23_ref: (2, 128, 128)   bf16  [0]=fc2, [1]=fc3, zero-padded
    b_ref  : (3, 128)        f32   rows = fc1/fc2/fc3 biases, zero-padded
    o_ref  : (tile_b, 8)     f32   narrow logits; cols >= 3 are exactly zero
    """
    x = x_ref[...]          # (tile_b, 4) f32
    w1 = w1_ref[...]        # (4, 128)    f32

    # Layer 1 on the VPU: K=4 makes an MXU pass ~3% utilized, so use 4 broadcast FMAs.
    h1 = b_ref[0:1, :]
    h1 = h1 + x[:, 0:1] * w1[0:1, :]
    h1 = h1 + x[:, 1:2] * w1[1:2, :]
    h1 = h1 + x[:, 2:3] * w1[2:3, :]
    h1 = h1 + x[:, 3:4] * w1[3:4, :]
    h1 = jnp.maximum(h1, 0.0).astype(jnp.bfloat16)          # (tile_b, 128)

    # Layers 2 & 3 on the MXU (bf16 operands, f32 accumulation).
    h2 = jnp.dot(h1, w23_ref[0], preferred_element_type=jnp.float32) + b_ref[1:2, :]
    h2 = jnp.maximum(h2, 0.0).astype(jnp.bfloat16)          # (tile_b, 128)

    out = jnp.dot(h2, w23_ref[1], preferred_element_type=jnp.float32) + b_ref[2:3, :]
    o_ref[...] = out[:, :OUT_PAD].astype(o_ref.dtype)        # narrow, lane-zero-padded store


def pack_params(w1, b1, w2, b2, w3, b3):
    """Zero-pad layer widths to 128 lanes and pack into 3 arrays.

    Weights are in (in_features, out_features) layout (transposed vs. PyTorch's
    (out, in) storage) so the kernel computes y = x @ W + b.
    """
    w1p = jnp.zeros((IN_F, LANE), jnp.float32).at[:, :H1_F].set(w1.astype(jnp.float32))
    w2p = jnp.zeros((LANE, LANE), jnp.bfloat16).at[:H1_F, :H2_F].set(w2.astype(jnp.bfloat16))
    w3p = jnp.zeros((LANE, LANE), jnp.bfloat16).at[:H2_F, :OUT_F].set(w3.astype(jnp.bfloat16))
    w23p = jnp.stack([w2p, w3p])                      # (2, 128, 128) bf16
    bp = (jnp.zeros((3, LANE), jnp.float32)
          .at[0, :H1_F].set(b1)
          .at[1, :H2_F].set(b2)
          .at[2, :OUT_F].set(b3))                     # (3, 128) f32
    return w1p, w23p, bp


@jax.jit
def net_forward(x, w1p, w23p, bp):
    batch = x.shape[0]
    tile_b = _choose_tile(batch)
    pb = _round_up(batch, tile_b)

    xp = x.astype(jnp.float32)
    if pb != batch:
        xp = jnp.pad(xp, ((0, pb - batch), (0, 0)))

    out = pl.pallas_call(
        _mlp_kernel,
        out_shape=jax.ShapeDtypeStruct((pb, OUT_PAD), jnp.float32),
        grid=(pb // tile_b,),
        in_specs=[
            pl.BlockSpec((tile_b, IN_F), lambda i: (i, 0)),   # x: tiled over batch
            pl.BlockSpec(w1p.shape, lambda i: (0, 0)),        # fc1 weight (VMEM-resident)
            pl.BlockSpec(w23p.shape, lambda i: (0, 0, 0)),    # fc2/fc3 weights (resident)
            pl.BlockSpec(bp.shape, lambda i: (0, 0)),         # biases (resident)
        ],
        out_specs=pl.BlockSpec((tile_b, OUT_PAD), lambda i: (i, 0)),
        compiler_params=pltpu.CompilerParams(
            dimension_semantics=("parallel",),      # batch tiles shard across TCs (v7x)
            vmem_limit_bytes=_VMEM_LIMIT,           # 32 MiB on v7x, 64 MiB on v5e/v6e
        ),
    )(xp, w1p, w23p, bp)

    # Drop batch padding and the 5 zero lane-padding columns (tiny: 32 B/row -> 12 B/row).
    return out[:batch, :OUT_F]


def _init_linear(key, in_features, out_features):
    """PyTorch nn.Linear default init (U[-k, k], k = 1/sqrt(fan_in)); W stored (in, out)."""
    kw, kb = jax.random.split(key)
    bound = 1.0 / np.sqrt(in_features)
    w = jax.random.uniform(kw, (in_features, out_features), jnp.float32, -bound, bound)
    b = jax.random.uniform(kb, (out_features,), jnp.float32, -bound, bound)
    return w, b


def _reference_mixed(x, w1, b1, w2, b2, w3, b3):
    """Plain-JAX forward mirroring the kernel's precision (f32 fc1, bf16 fc2/fc3 on MXU)."""
    h1 = jnp.maximum(x.astype(jnp.float32) @ w1 + b1, 0.0).astype(jnp.bfloat16)
    h2 = jnp.maximum(
        jnp.dot(h1, w2.astype(jnp.bfloat16), preferred_element_type=jnp.float32) + b2, 0.0
    ).astype(jnp.bfloat16)
    return jnp.dot(h2, w3.astype(jnp.bfloat16), preferred_element_type=jnp.float32) + b3


if __name__ == "__main__":
    key = jax.random.PRNGKey(0)
    k_x, k1, k2, k3 = jax.random.split(key, 4)

    batch = 8
    x = jax.random.normal(k_x, (batch, IN_F), dtype=jnp.float32)

    w1, b1 = _init_linear(k1, IN_F, H1_F)
    w2, b2 = _init_linear(k2, H1_F, H2_F)
    w3, b3 = _init_linear(k3, H2_F, OUT_F)

    w1p, w23p, bp = pack_params(w1, b1, w2, b2, w3, b3)
    out = jax.block_until_ready(net_forward(x, w1p, w23p, bp))
    assert out.shape == (batch, OUT_F)

    # Check against a plain-JAX reference with the same mixed precision.
    ref_mixed = _reference_mixed(x, w1, b1, w2, b2, w3, b3)
    np.testing.assert_allclose(np.asarray(out), np.asarray(ref_mixed), rtol=1e-2, atol=1e-2)

    # Sanity check against the full-f32 PyTorch-equivalent reference (bf16 fc2/fc3 adds
    # small error; acceptable for classification logits).
    ref_f32 = jnp.maximum(x @ w1 + b1, 0.0)
    ref_f32 = jnp.maximum(ref_f32 @ w2 + b2, 0.0)
    ref_f32 = ref_f32 @ w3 + b3
    np.testing.assert_allclose(np.asarray(out), np.asarray(ref_f32), rtol=5e-2, atol=5e-2)

    print("KERNEL_OK")
</pallas_src>

<mosaic_0001>
module attributes {stable_mosaic.version = 11 : i64} {
  func.func @_mlp_kernel(%arg0: i32, %arg1: memref<16x4xf32, #tpu.memory_space<vmem>>, %arg2: memref<4x128xf32, #tpu.memory_space<vmem>>, %arg3: memref<2x128x128xbf16, #tpu.memory_space<vmem>>, %arg4: memref<3x128xf32, #tpu.memory_space<vmem>>, %arg5: memref<16x8xf32, #tpu.memory_space<vmem>>) attributes {dimension_semantics = [#tpu.dimension_semantics<parallel>], iteration_bounds = array<i64: 1>, scalar_prefetch = 0 : i64, scratch_operands = 0 : i64, tpu.core_type = #tpu.core_type<tc>, window_params = [{transform_indices = @transform_0, window_bounds = array<i64: 16, 4>}, {pipeline_mode = #tpu.pipeline_mode<synchronous>, transform_indices = @transform_1, window_bounds = array<i64: 4, 128>}, {pipeline_mode = #tpu.pipeline_mode<synchronous>, transform_indices = @transform_2, window_bounds = array<i64: 2, 128, 128>}, {pipeline_mode = #tpu.pipeline_mode<synchronous>, transform_indices = @transform_3, window_bounds = array<i64: 3, 128>}, {transform_indices = @transform_4, window_bounds = array<i64: 16, 8>}]} {
    %c0 = arith.constant 0 : index
    %c0_0 = arith.constant 0 : index
    %0 = vector.load %arg1[%c0, %c0_0] : memref<16x4xf32, #tpu.memory_space<vmem>>, vector<16x4xf32>
    %c0_1 = arith.constant 0 : index
    %c0_2 = arith.constant 0 : index
    %1 = vector.load %arg2[%c0_1, %c0_2] : memref<4x128xf32, #tpu.memory_space<vmem>>, vector<4x128xf32>
    %c0_3 = arith.constant 0 : index
    %c0_4 = arith.constant 0 : index
    %2 = vector.load %arg4[%c0_3, %c0_4] : memref<3x128xf32, #tpu.memory_space<vmem>>, vector<1x128xf32>
    %3 = vector.extract_strided_slice %0 {offsets = [0, 0], sizes = [16, 1], strides = [1, 1]} : vector<16x4xf32> to vector<16x1xf32>
    %4 = vector.extract_strided_slice %1 {offsets = [0, 0], sizes = [1, 128], strides = [1, 1]} : vector<4x128xf32> to vector<1x128xf32>
    %5 = vector.broadcast %3 : vector<16x1xf32> to vector<16x128xf32>
    %6 = vector.broadcast %4 : vector<1x128xf32> to vector<16x128xf32>
    %7 = arith.mulf %5, %6 : vector<16x128xf32>
    %8 = vector.broadcast %2 : vector<1x128xf32> to vector<16x128xf32>
    %9 = arith.addf %8, %7 : vector<16x128xf32>
    %10 = vector.extract_strided_slice %0 {offsets = [0, 1], sizes = [16, 1], strides = [1, 1]} : vector<16x4xf32> to vector<16x1xf32>
    %11 = vector.extract_strided_slice %1 {offsets = [1, 0], sizes = [1, 128], strides = [1, 1]} : vector<4x128xf32> to vector<1x128xf32>
    %12 = vector.broadcast %10 : vector<16x1xf32> to vector<16x128xf32>
    %13 = vector.broadcast %11 : vector<1x128xf32> to vector<16x128xf32>
    %14 = arith.mulf %12, %13 : vector<16x128xf32>
    %15 = arith.addf %9, %14 : vector<16x128xf32>
    %16 = vector.extract_strided_slice %0 {offsets = [0, 2], sizes = [16, 1], strides = [1, 1]} : vector<16x4xf32> to vector<16x1xf32>
    %17 = vector.extract_strided_slice %1 {offsets = [2, 0], sizes = [1, 128], strides = [1, 1]} : vector<4x128xf32> to vector<1x128xf32>
    %18 = vector.broadcast %16 : vector<16x1xf32> to vector<16x128xf32>
    %19 = vector.broadcast %17 : vector<1x128xf32> to vector<16x128xf32>
    %20 = arith.mulf %18, %19 : vector<16x128xf32>
    %21 = arith.addf %15, %20 : vector<16x128xf32>
    %22 = vector.extract_strided_slice %0 {offsets = [0, 3], sizes = [16, 1], strides = [1, 1]} : vector<16x4xf32> to vector<16x1xf32>
    %23 = vector.extract_strided_slice %1 {offsets = [3, 0], sizes = [1, 128], strides = [1, 1]} : vector<4x128xf32> to vector<1x128xf32>
    %24 = vector.broadcast %22 : vector<16x1xf32> to vector<16x128xf32>
    %25 = vector.broadcast %23 : vector<1x128xf32> to vector<16x128xf32>
    %26 = arith.mulf %24, %25 : vector<16x128xf32>
    %27 = arith.addf %21, %26 : vector<16x128xf32>
    %cst = arith.constant 0.000000e+00 : f32
    %28 = vector.broadcast %cst : f32 to vector<16x128xf32>
    %29 = arith.maximumf %27, %28 : vector<16x128xf32>
    %30 = arith.truncf %29 : vector<16x128xf32> to vector<16x128xbf16>
    %c0_5 = arith.constant 0 : index
    %c0_6 = arith.constant 0 : index
    %c0_7 = arith.constant 0 : index
    %31 = vector.load %arg3[%c0_5, %c0_6, %c0_7] : memref<2x128x128xbf16, #tpu.memory_space<vmem>>, vector<1x128x128xbf16>
    %32 = vector.shape_cast %31 : vector<1x128x128xbf16> to vector<128x128xbf16>
    %cst_8 = arith.constant dense<0.000000e+00> : vector<16x128xf32>
    %33 = tpu.matmul %30, %32, %cst_8 {dimension_numbers = #tpu.dot_dimension_numbers<[1], [0], [0], [1], [0, 0, 1, 1], [], []>} : vector<16x128xbf16>, vector<128x128xbf16>, vector<16x128xf32> -> vector<16x128xf32>
    %c1 = arith.constant 1 : index
    %c0_9 = arith.constant 0 : index
    %34 = vector.load %arg4[%c1, %c0_9] : memref<3x128xf32, #tpu.memory_space<vmem>>, vector<1x128xf32>
    %35 = vector.broadcast %34 : vector<1x128xf32> to vector<16x128xf32>
    %36 = arith.addf %33, %35 : vector<16x128xf32>
    %cst_10 = arith.constant 0.000000e+00 : f32
    %37 = vector.broadcast %cst_10 : f32 to vector<16x128xf32>
    %38 = arith.maximumf %36, %37 : vector<16x128xf32>
    %39 = arith.truncf %38 : vector<16x128xf32> to vector<16x128xbf16>
    %c1_11 = arith.constant 1 : index
    %c0_12 = arith.constant 0 : index
    %c0_13 = arith.constant 0 : index
    %40 = vector.load %arg3[%c1_11, %c0_12, %c0_13] : memref<2x128x128xbf16, #tpu.memory_space<vmem>>, vector<1x128x128xbf16>
    %41 = vector.shape_cast %40 : vector<1x128x128xbf16> to vector<128x128xbf16>
    %cst_14 = arith.constant dense<0.000000e+00> : vector<16x128xf32>
    %42 = tpu.matmul %39, %41, %cst_14 {dimension_numbers = #tpu.dot_dimension_numbers<[1], [0], [0], [1], [0, 0, 1, 1], [], []>} : vector<16x128xbf16>, vector<128x128xbf16>, vector<16x128xf32> -> vector<16x128xf32>
    %c2 = arith.constant 2 : index
    %c0_15 = arith.constant 0 : index
    %43 = vector.load %arg4[%c2, %c0_15] : memref<3x128xf32, #tpu.memory_space<vmem>>, vector<1x128xf32>
    %44 = vector.broadcast %43 : vector<1x128xf32> to vector<16x128xf32>
    %45 = arith.addf %42, %44 : vector<16x128xf32>
    %46 = vector.extract_strided_slice %45 {offsets = [0, 0], sizes = [16, 8], strides = [1, 1]} : vector<16x128xf32> to vector<16x8xf32>
    %c0_16 = arith.constant 0 : index
    %c0_17 = arith.constant 0 : index
    %47 = vector.load %arg5[%c0_16, %c0_17] : memref<16x8xf32, #tpu.memory_space<vmem>>, vector<16x8xf32>
    tpu.vector_store %arg5[%c0_16, %c0_17], %46 {strides = array<i32>} : memref<16x8xf32, #tpu.memory_space<vmem>>, vector<16x8xf32>,
    return
  }
  func.func @transform_0(%arg0: i32) -> (i32, i32) {
    %c0_i32 = arith.constant 0 : i32
    %c0_i32_0 = arith.constant 0 : i32
    return %arg0, %c0_i32 : i32, i32
  }
  func.func @transform_1(%arg0: i32) -> (i32, i32) {
    %c0_i32 = arith.constant 0 : i32
    %c0_i32_0 = arith.constant 0 : i32
    %c0_i32_1 = arith.constant 0 : i32
    return %c0_i32, %c0_i32_0 : i32, i32
  }
  func.func @transform_2(%arg0: i32) -> (i32, i32, i32) {
    %c0_i32 = arith.constant 0 : i32
    %c0_i32_0 = arith.constant 0 : i32
    %c0_i32_1 = arith.constant 0 : i32
    %c0_i32_2 = arith.constant 0 : i32
    return %c0_i32, %c0_i32_0, %c0_i32_1 : i32, i32, i32
  }
  func.func @transform_3(%arg0: i32) -> (i32, i32) {
    %c0_i32 = arith.constant 0 : i32
    %c0_i32_0 = arith.constant 0 : i32
    %c0_i32_1 = arith.constant 0 : i32
    return %c0_i32, %c0_i32_0 : i32, i32
  }
  func.func @transform_4(%arg0: i32) -> (i32, i32) {
    %c0_i32 = arith.constant 0 : i32
    %c0_i32_0 = arith.constant 0 : i32
    return %arg0, %c0_i32 : i32, i32
  }
}

</mosaic_0001>

<llo_original>
// kernel: net_forward.1
$region0: #{net_forward.1}
  #allocation0 [shape = 'u32[]', space=smem, size = 0x4, offset = 0x4, fixed_abs, tag = 'smem constant byte address 0x4 - core index']
  #allocation1 [shape = 'u32[72,128]{1,0:T(1,128)}', space=vmem, size = 0x9000, scoped, tag = 'internal scratch']
  %s0 = inlined_call_operand.vmem [shape: f32[16,4], index: 0, kind: input, shape index: {}]
  %s1 = inlined_call_operand.vmem [shape: f32[4,128], index: 1, kind: input, shape index: {}]
  %s2 = inlined_call_operand.hbm [shape: bf16[2,128,128], index: 2, kind: input, shape index: {}]
  %s3 = inlined_call_operand.vmem [shape: f32[3,128], index: 3, kind: input, shape index: {}]
  %s4 = inlined_call_operand.vmem [shape: f32[16,8], index: 4, kind: output, shape index: {}]
  %s5 = sld [smem:[#allocation0]]
  $region30: #{net_forward.1} parent=0
    _
  %s7 = ssub.s32 1, %s5
  %s8 = scalar_select 0, %s7, %s5
  $region1: #{net_forward.1} parent=0
    #allocation2 [shape = 'u8[65536]{0}', space=vmem, size = 0x10000, scoped, tag = 'input window, operand 2, single buffered']
    #allocation3 [shape = 's32[1]{0}', space=sflag, size = 0x4, scoped, tag = 'scoped memory for net_forward.1']
    %9 = vsyncpa [#allocation3], 0
    // Predicated region
    $region2: #{net_forward.1} parent=1 // pred_check
      _
    $region3: #{net_forward.1} parent=1 // pred_check_branch
      %11 = sbr.rel (0) target = $region5
    $region4: #{net_forward.1} parent=1 // pred_region
      _
    $region5: #{net_forward.1} parent=1 // pred_fallthru
      _
    // Predicated region
    $region6: #{net_forward.1} parent=1 // pred_check
      _
    $region7: #{net_forward.1} parent=1 // pred_check_branch
      %13 = sbr.rel (0) target = $region9
    $region8: #{net_forward.1} parent=1 // pred_region
      _
    $region9: #{net_forward.1} parent=1 // pred_fallthru
      _
    // Predicated region
    $region10: #{net_forward.1} parent=1 // pred_check
      _
    $region11: #{net_forward.1} parent=1 // pred_check_branch
      %15 = sbr.rel (0) target = $region13
    $region12: #{net_forward.1} parent=1 // pred_region
      %17 = vsyncadd [#allocation3], 0
      %s18 = sshll.u32 %s2, 4
      %s19 = int_to_ptr.hbm [resolvable:$true] %s18
      %s20 = sshll.u32 [#allocation2], 4
      %s21 = int_to_ptr.vmem [resolvable:$true] %s20
      %26 = dma.hbm_to_vmem [thread:$0]  %s19, 2048, %s21, [#allocation3], 64, 64, 4
    $region13: #{net_forward.1} parent=1 // pred_fallthru
      _
    // Predicated region
    $region14: #{net_forward.1} parent=1 // pred_check
      _
    $region15: #{net_forward.1} parent=1 // pred_check_branch
      %28 = sbr.rel (0) target = $region17
    $region16: #{net_forward.1} parent=1 // pred_region
      _
    $region17: #{net_forward.1} parent=1 // pred_fallthru
      _
    // Predicated region
    $region18: #{net_forward.1} parent=1 // pred_check
      _
    $region19: #{net_forward.1} parent=1 // pred_check_branch
      %30 = sbr.rel (0) target = $region21
    $region20: #{net_forward.1} parent=1 // pred_region
      %32 = dma.done [#allocation3], 2048
    $region21: #{net_forward.1} parent=1 // pred_fallthru
      _
    %v33 = vld [vmem:[%s0] sm:$0xff]
    %v34 = vld [vmem:[%s0 + $0x8] sm:$0xff]
    %v35 = vld [vmem:[%s1] sm:$0xf]
    %v36 = vld [vmem:[%s3] sm:$0x1]
    %38 = vset.pattern.permute.xlu0 0
    %39 = vperm.xlu0 %38, %v33
    %v40 = vpop.permute.xlu0 %39
    %43 = vset.pattern.permute.xlu0 0
    %44 = vperm.xlu0 %43, %v34
    %v45 = vpop.permute.xlu0 %44
    %v47 = vperm.slane %v35, 0
    %v48 = vmul.f32 %v40, %v47
    %v49 = vmul.f32 %v45, %v47
    %v50 = vperm.slane %v36, 0
    %v51 = vadd.f32 %v50, %v48
    %v52 = vadd.f32 %v50, %v49
    %53 = vset.pattern.permute.xlu0 1
    %54 = vperm.xlu0 %53, %v33
    %v55 = vpop.permute.xlu0 %54
    %57 = vset.pattern.permute.xlu0 1
    %58 = vperm.xlu0 %57, %v34
    %v59 = vpop.permute.xlu0 %58
    %v61 = vperm.slane %v35, 1
    %v62 = vmul.f32 %v55, %v61
    %v63 = vmul.f32 %v59, %v61
    %v64 = vadd.f32 %v51, %v62
    %v65 = vadd.f32 %v52, %v63
    %66 = vset.pattern.permute.xlu0 2
    %67 = vperm.xlu0 %66, %v33
    %v68 = vpop.permute.xlu0 %67
    %70 = vset.pattern.permute.xlu0 2
    %71 = vperm.xlu0 %70, %v34
    %v72 = vpop.permute.xlu0 %71
    %v74 = vperm.slane %v35, 2
    %v75 = vmul.f32 %v68, %v74
    %v76 = vmul.f32 %v72, %v74
    %v77 = vadd.f32 %v64, %v75
    %v78 = vadd.f32 %v65, %v76
    %79 = vset.pattern.permute.xlu0 3
    %80 = vperm.xlu0 %79, %v33
    %v81 = vpop.permute.xlu0 %80
    %83 = vset.pattern.permute.xlu0 3
    %84 = vperm.xlu0 %83, %v34
    %v85 = vpop.permute.xlu0 %84
    %v87 = vperm.slane %v35, 3
    %v88 = vmul.f32 %v81, %v87
    %v89 = vmul.f32 %v85, %v87
    %v90 = vadd.f32 %v77, %v88
    %v91 = vadd.f32 %v78, %v89
    %v92 = vmax.f32 %v90, 0.0
    %v93 = vmax.f32 %v91, 0.0
    %v94 = vpack.c.bf16 %v93, %v92
    %v95 = vld [vmem:[#allocation2] sm:$0xf]
    %v96 = vld [vmem:[#allocation2 + $0x4] sm:$0xf]
    %v97 = vld [vmem:[#allocation2 + $0x8] sm:$0xf]
    %v98 = vld [vmem:[#allocation2 + $0xc] sm:$0xf]
    %v99 = vld [vmem:[#allocation2 + $0x10] sm:$0xf]
    %v100 = vld [vmem:[#allocation2 + $0x14] sm:$0xf]
    %v101 = vld [vmem:[#allocation2 + $0x18] sm:$0xf]
    %v102 = vld [vmem:[#allocation2 + $0x1c] sm:$0xf]
    %v103 = vld [vmem:[#allocation2 + $0x20] sm:$0xf]
    %v104 = vld [vmem:[#allocation2 + $0x24] sm:$0xf]
    %v105 = vld [vmem:[#allocation2 + $0x28] sm:$0xf]
    %v106 = vld [vmem:[#allocation2 + $0x2c] sm:$0xf]
    %v107 = vld [vmem:[#allocation2 + $0x30] sm:$0xf]
    %v108 = vld [vmem:[#allocation2 + $0x34] sm:$0xf]
    %v109 = vld [vmem:[#allocation2 + $0x38] sm:$0xf]
    %v110 = vld [vmem:[#allocation2 + $0x3c] sm:$0xf]
    %v111 = vld [vmem:[%s3 + $0x1] sm:$0x1]
    %v112 = vperm.slane %v111, 0
    %v129 = vunpack.c.l.b16 %v95
    %v130 = vunpack.c.l.b16 %v96
    %v131 = vunpack.c.l.b16 %v97
    %v132 = vunpack.c.l.b16 %v98
    %v133 = vunpack.c.l.b16 %v99
    %v134 = vunpack.c.l.b16 %v100
    %v135 = vunpack.c.l.b16 %v101
    %v136 = vunpack.c.l.b16 %v102
    %v137 = vunpack.c.l.b16 %v103
    %v138 = vunpack.c.l.b16 %v104
    %v139 = vunpack.c.l.b16 %v105
    %v140 = vunpack.c.l.b16 %v106
    %v141 = vunpack.c.l.b16 %v107
    %v142 = vunpack.c.l.b16 %v108
    %v143 = vunpack.c.l.b16 %v109
    %v144 = vunpack.c.l.b16 %v110
    %v145 = vpack.c.b16 %v130, %v129
    %v146 = vpack.c.b16 %v132, %v131
    %v147 = vpack.c.b16 %v134, %v133
    %v148 = vpack.c.b16 %v136, %v135
    %v149 = vpack.c.b16 %v138, %v137
    %v150 = vpack.c.b16 %v140, %v139
    %v151 = vpack.c.b16 %v142, %v141
    %v152 = vpack.c.b16 %v144, %v143
    %161 = vmatpush.bf16.msra.mxu0 %v152
    %162 = vmatpush.bf16.msra.mxu0 %v151
    %163 = vmatpush.bf16.msra.mxu0 %v150
    %164 = vmatpush.bf16.msra.mxu0 %v149
    %165 = vmatpush.bf16.msra.mxu0 %v148
    %166 = vmatpush.bf16.msra.mxu0 %v147
    %167 = vmatpush.bf16.msra.mxu0 %v146
    %168 = vmatpush.bf16.msra.mxu0 %v145
    %169 = vmatmul.bf16.gmra.mxu0 %v94
    %v170 = vpop.f32.mrf.mxu0
    %v171 = vadd.f32 %v112, %v170
    %v172 = vpop.f32.mrf.mxu0
    %v173 = vadd.f32 %v112, %v172
    %174 = vdwg.mxu0
    %v175 = vmax.f32 %v171, 0.0
    %v176 = vmax.f32 %v173, 0.0
    %v177 = vpack.c.bf16 %v176, %v175
    %s178 = scalar_lea.vmem [#allocation2], 64
    %v179 = vld [vmem:[%s178] sm:$0xf]
    %v180 = vld [vmem:[%s178 + $0x4] sm:$0xf]
    %v181 = vld [vmem:[%s178 + $0x8] sm:$0xf]
    %v182 = vld [vmem:[%s178 + $0xc] sm:$0xf]
    %v183 = vld [vmem:[%s178 + $0x10] sm:$0xf]
    %v184 = vld [vmem:[%s178 + $0x14] sm:$0xf]
    %v185 = vld [vmem:[%s178 + $0x18] sm:$0xf]
    %v186 = vld [vmem:[%s178 + $0x1c] sm:$0xf]
    %v187 = vld [vmem:[%s178 + $0x20] sm:$0xf]
    %v188 = vld [vmem:[%s178 + $0x24] sm:$0xf]
    %v189 = vld [vmem:[%s178 + $0x28] sm:$0xf]
    %v190 = vld [vmem:[%s178 + $0x2c] sm:$0xf]
    %v191 = vld [vmem:[%s178 + $0x30] sm:$0xf]
    %v192 = vld [vmem:[%s178 + $0x34] sm:$0xf]
    %v193 = vld [vmem:[%s178 + $0x38] sm:$0xf]
    %v194 = vld [vmem:[%s178 + $0x3c] sm:$0xf]
    %v195 = vld [vmem:[%s3 + $0x2] sm:$0x1]
    %v196 = vperm.slane %v195, 0
    %v213 = vunpack.c.l.b16 %v179
    %v214 = vunpack.c.l.b16 %v180
    %v215 = vunpack.c.l.b16 %v181
    %v216 = vunpack.c.l.b16 %v182
    %v217 = vunpack.c.l.b16 %v183
    %v218 = vunpack.c.l.b16 %v184
    %v219 = vunpack.c.l.b16 %v185
    %v220 = vunpack.c.l.b16 %v186
    %v221 = vunpack.c.l.b16 %v187
    %v222 = vunpack.c.l.b16 %v188
    %v223 = vunpack.c.l.b16 %v189
    %v224 = vunpack.c.l.b16 %v190
    %v225 = vunpack.c.l.b16 %v191
    %v226 = vunpack.c.l.b16 %v192
    %v227 = vunpack.c.l.b16 %v193
    %v228 = vunpack.c.l.b16 %v194
    %v229 = vpack.c.b16 %v214, %v213
    %v230 = vpack.c.b16 %v216, %v215
    %v231 = vpack.c.b16 %v218, %v217
    %v232 = vpack.c.b16 %v220, %v219
    %v233 = vpack.c.b16 %v222, %v221
    %v234 = vpack.c.b16 %v224, %v223
    %v235 = vpack.c.b16 %v226, %v225
    %v236 = vpack.c.b16 %v228, %v227
    %245 = vmatpush.bf16.msra.mxu0 %v236
    %246 = vmatpush.bf16.msra.mxu0 %v235
    %247 = vmatpush.bf16.msra.mxu0 %v234
    %248 = vmatpush.bf16.msra.mxu0 %v233
    %249 = vmatpush.bf16.msra.mxu0 %v232
    %250 = vmatpush.bf16.msra.mxu0 %v231
    %251 = vmatpush.bf16.msra.mxu0 %v230
    %252 = vmatpush.bf16.msra.mxu0 %v229
    %253 = vmatmul.bf16.gmra.mxu0 %v177
    %v254 = vpop.f32.mrf.mxu0
    %v255 = vadd.f32 %v196, %v254
    %v256 = vpop.f32.mrf.mxu0
    %v257 = vadd.f32 %v196, %v256
    %258 = vdwg.mxu0
    %vm259 = vcmask 64512
    %260 = vst.msk [vmem:[%s4] sm:$0xff] %vm259, %v255
    %261 = vst.msk [vmem:[%s4 + $0x8] sm:$0xff] %vm259, %v257
    // Predicated region
    $region22: #{net_forward.1} parent=1 // pred_check
      _
    $region23: #{net_forward.1} parent=1 // pred_check_branch
      %263 = sbr.rel (0) target = $region25
    $region24: #{net_forward.1} parent=1 // pred_region
      _
    $region25: #{net_forward.1} parent=1 // pred_fallthru
      _
    // Predicated region
    $region26: #{net_forward.1} parent=1 // pred_check
      _
    $region27: #{net_forward.1} parent=1 // pred_check_branch
      %265 = sbr.rel (0) target = $region29
    $region28: #{net_forward.1} parent=1 // pred_region
      _
    $region29: #{net_forward.1} parent=1 // pred_fallthru
      _
    %266 = vsyncpa [#allocation3], 1

</llo_original>
